<compile_context>
chip_gen: v7x
topology: tpu7x:2x2x1
jax: 0.10.0
libtpu: 0.0.40
codegen_flags: <defaults>
</compile_context>

<pallas_src>
import jax
import jax.numpy as jnp
from jax.experimental import pallas as pl
from jax.experimental.pallas import tpu as pltpu


def _model_kernel(lhs_ref, rhs_ref, o_ref):
    # One MXU matmul, result already in the final output layout.
    o_ref[...] = jnp.dot(
        lhs_ref[...], rhs_ref[...], preferred_element_type=jnp.float32
    ).astype(o_ref.dtype)


def model_forward(x1, x2, x3):
    n = x1.shape[0]            # 4
    out_cols = 7 * x2.shape[1]  # 28
    z = jnp.zeros_like(x1)

    # Wrapper-side packing (fuses into upstream XLA, cuts input DMAs to 2):
    #   lhs = [x1 | x2]                                  (n, 2n)
    #   rhs = [[x2, 0, x3, x3, x3, 0,  0 ],
    #          [0,  x1, 0,  0,  0,  x3, x3]]             (2n, 7n)
    lhs = jnp.concatenate([x1, x2], axis=1)
    rhs_top = jnp.concatenate([x2, z, x3, x3, x3, z, z], axis=1)
    rhs_bot = jnp.concatenate([z, x1, z, z, z, x3, x3], axis=1)
    rhs = jnp.concatenate([rhs_top, rhs_bot], axis=0)

    vmem_spec = pl.BlockSpec(memory_space=pltpu.VMEM)

    # 2 * n * 2n * 7n flops; lhs + rhs + out bytes.
    cost = pl.CostEstimate(
        flops=2 * n * (2 * n) * out_cols,
        transcendentals=0,
        bytes_accessed=(n * 2 * n + 2 * n * out_cols + n * out_cols) * 4,
    )

    return pl.pallas_call(
        _model_kernel,
        out_shape=jax.ShapeDtypeStruct((n, out_cols), jnp.float32),
        grid=(),
        in_specs=[vmem_spec, vmem_spec],
        out_specs=vmem_spec,
        cost_estimate=cost,
    )(lhs, rhs)


def _reference(x1, x2, x3):
    v1 = x1 @ x2
    v2 = x2 @ x1
    v3 = x1 @ x3
    v6 = x2 @ x3
    return jnp.concatenate([v1, v2, v3, v3, v3, v6, v6], axis=1)


if __name__ == "__main__":
    key = jax.random.PRNGKey(0)
    k1, k2, k3 = jax.random.split(key, 3)
    x1 = jax.random.normal(k1, (4, 4), dtype=jnp.float32)
    x2 = jax.random.normal(k2, (4, 4), dtype=jnp.float32)
    x3 = jax.random.normal(k3, (4, 4), dtype=jnp.float32)

    out = model_forward(x1, x2, x3)
    jax.block_until_ready(out)

    ref = _reference(x1, x2, x3)
    assert out.shape == (4, 28), out.shape
    assert jnp.allclose(out, ref, atol=1e-5, rtol=1e-5), "mismatch vs reference"

    print("KERNEL_OK")
</pallas_src>

<mosaic_0001>
module attributes {stable_mosaic.version = 11 : i64} {
  func.func @_model_kernel(%arg0: memref<4x8xf32, #tpu.memory_space<vmem>>, %arg1: memref<8x28xf32, #tpu.memory_space<vmem>>, %arg2: memref<4x28xf32, #tpu.memory_space<vmem>>) attributes {dimension_semantics = [], scalar_prefetch = 0 : i64, scratch_operands = 0 : i64, tpu.core_type = #tpu.core_type<tc>} {
    %c0 = arith.constant 0 : index
    %c0_0 = arith.constant 0 : index
    %0 = vector.load %arg0[%c0, %c0_0] : memref<4x8xf32, #tpu.memory_space<vmem>>, vector<4x8xf32>
    %c0_1 = arith.constant 0 : index
    %c0_2 = arith.constant 0 : index
    %1 = vector.load %arg1[%c0_1, %c0_2] : memref<8x28xf32, #tpu.memory_space<vmem>>, vector<8x28xf32>
    %cst = arith.constant dense<0.000000e+00> : vector<4x28xf32>
    %2 = tpu.matmul %0, %1, %cst {dimension_numbers = #tpu.dot_dimension_numbers<[1], [0], [0], [1], [0, 0, 1, 1], [], []>} : vector<4x8xf32>, vector<8x28xf32>, vector<4x28xf32> -> vector<4x28xf32>
    %c0_3 = arith.constant 0 : index
    %c0_4 = arith.constant 0 : index
    %3 = vector.load %arg2[%c0_3, %c0_4] : memref<4x28xf32, #tpu.memory_space<vmem>>, vector<4x28xf32>
    tpu.vector_store %arg2[%c0_3, %c0_4], %2 {strides = array<i32>} : memref<4x28xf32, #tpu.memory_space<vmem>>, vector<4x28xf32>,
    return
  }
}

</mosaic_0001>

<llo_original>
// kernel: tpu_custom_call.1
$region0: #{tpu_custom_call.1}
  #allocation0 [shape = 'u32[]', space=smem, size = 0x4, offset = 0x4, fixed_abs, tag = 'smem constant byte address 0x4 - core index']
  #allocation1 [shape = 'u32[144,128]{1,0:T(1,128)}', space=vmem, size = 0x12000, scoped, tag = 'internal scratch']
  %s0 = inlined_call_operand.hbm [shape: f32[4,8], index: 0, kind: input, shape index: {}]
  %s1 = inlined_call_operand.hbm [shape: f32[8,28], index: 1, kind: input, shape index: {}]
  %s2 = inlined_call_operand.hbm [shape: f32[4,28], index: 2, kind: output, shape index: {}]
  %s3 = sld [smem:[#allocation0]]
  $region26: #{tpu_custom_call.1} parent=0
    _
  %s5 = ssub.s32 1, %s3
  %s6 = scalar_select 0, %s5, %s3
  $region1: #{tpu_custom_call.1} parent=0
    #allocation2 [shape = 'u8[2048]{0}', space=vmem, size = 0x800, scoped, tag = 'input window, operand 0, single buffered']
    #allocation3 [shape = 's32[1]{0}', space=sflag, size = 0x4, scoped, tag = 'scoped memory for tpu_custom_call.1']
    #allocation4 [shape = 's32[1]{0}', space=sflag, size = 0x4, scoped, tag = 'scoped memory for tpu_custom_call.1']
    #allocation5 [shape = 'u8[4096]{0}', space=vmem, size = 0x1000, scoped, tag = 'input window, operand 1, single buffered']
    #allocation6 [shape = 's32[1]{0}', space=sflag, size = 0x4, scoped, tag = 'scoped memory for tpu_custom_call.1']
    #allocation7 [shape = 'u8[2048]{0}', space=vmem, size = 0x800, scoped, tag = 'output window, operand 0, single buffered']
    %7 = vsyncpa [#allocation3], 0
    %8 = vsyncpa [#allocation6], 0
    %9 = vsyncpa [#allocation4], 0
    // Predicated region
    $region2: #{tpu_custom_call.1} parent=1 // pred_check
      _
    $region3: #{tpu_custom_call.1} parent=1 // pred_check_branch
      %11 = sbr.rel (0) target = $region5
    $region4: #{tpu_custom_call.1} parent=1 // pred_region
      %s13 = ssub.s32 64, 64
      %14 = vsyncadd [#allocation3], %s13
      %s16 = sshll.u32 [#allocation2], 4
      %s17 = int_to_ptr.vmem [resolvable:$true] %s16
      %19 = dma.hbm_to_vmem [thread:$0]  %s0, 64, %s17, [#allocation3]
    $region5: #{tpu_custom_call.1} parent=1 // pred_fallthru
      _
    // Predicated region
    $region6: #{tpu_custom_call.1} parent=1 // pred_check
      _
    $region7: #{tpu_custom_call.1} parent=1 // pred_check_branch
      %21 = sbr.rel (0) target = $region9
    $region8: #{tpu_custom_call.1} parent=1 // pred_region
      %s23 = ssub.s32 128, 128
      %24 = vsyncadd [#allocation6], %s23
      %s26 = sshll.u32 [#allocation5], 4
      %s27 = int_to_ptr.vmem [resolvable:$true] %s26
      %29 = dma.hbm_to_vmem [thread:$0]  %s1, 128, %s27, [#allocation6]
    $region9: #{tpu_custom_call.1} parent=1 // pred_fallthru
      _
    // Predicated region
    $region10: #{tpu_custom_call.1} parent=1 // pred_check
      _
    $region11: #{tpu_custom_call.1} parent=1 // pred_check_branch
      %31 = sbr.rel (0) target = $region13
    $region12: #{tpu_custom_call.1} parent=1 // pred_region
      %32 = dma.done [#allocation3], 64
    $region13: #{tpu_custom_call.1} parent=1 // pred_fallthru
      _
    // Predicated region
    $region14: #{tpu_custom_call.1} parent=1 // pred_check
      _
    $region15: #{tpu_custom_call.1} parent=1 // pred_check_branch
      %34 = sbr.rel (0) target = $region17
    $region16: #{tpu_custom_call.1} parent=1 // pred_region
      %35 = dma.done [#allocation6], 128
    $region17: #{tpu_custom_call.1} parent=1 // pred_fallthru
      _
    %v36 = vld [vmem:[#allocation2] sm:$0xf]
    %v37 = vld [vmem:[#allocation5] sm:$0xff]
    %vm38 = vcmask 64512
    %v40 = vsel %vm38, %v36, 0
    %42 = vmatprep.subr.mxu0 0.0
    %43 = vmatpush1.msra.mxu0 %v37
    %44 = vmatprep.subr.mxu0 0.0
    %45 = vmatpush1.msra.mxu0 0.0
    %46 = vmatprep.subr.mxu0 0.0
    %47 = vmatpush1.msra.mxu0 0.0
    %48 = vmatprep.subr.mxu0 0.0
    %49 = vmatpush1.msra.mxu0 0.0
    %50 = vmatprep.subr.mxu0 0.0
    %51 = vmatpush1.msra.mxu0 0.0
    %52 = vmatprep.subr.mxu0 0.0
    %53 = vmatpush1.msra.mxu0 0.0
    %54 = vmatprep.subr.mxu0 0.0
    %55 = vmatpush1.msra.mxu0 0.0
    %56 = vmatprep.subr.mxu0 0.0
    %57 = vmatpush1.msra.mxu0 0.0
    %58 = vmatprep.subr.mxu0 0.0
    %59 = vmatpush1.msra.mxu0 0.0
    %60 = vmatprep.subr.mxu0 0.0
    %61 = vmatpush1.msra.mxu0 0.0
    %62 = vmatprep.subr.mxu0 0.0
    %63 = vmatpush1.msra.mxu0 0.0
    %64 = vmatprep.subr.mxu0 0.0
    %65 = vmatpush1.msra.mxu0 0.0
    %66 = vmatprep.subr.mxu0 0.0
    %67 = vmatpush1.msra.mxu0 0.0
    %68 = vmatprep.subr.mxu0 0.0
    %69 = vmatpush1.msra.mxu0 0.0
    %70 = vmatprep.subr.mxu0 0.0
    %71 = vmatpush1.msra.mxu0 0.0
    %72 = vmatprep.subr.mxu0 0.0
    %73 = vmatpush1.msra.mxu0 0.0
    %74 = vmatprep.subr.mxu0 0.0
    %75 = vmatpush1.msra.mxu0 0.0
    %76 = vmatprep.subr.mxu0 0.0
    %77 = vmatpush1.msra.mxu0 0.0
    %78 = vmatprep.subr.mxu0 0.0
    %79 = vmatpush1.msra.mxu0 0.0
    %80 = vmatprep.subr.mxu0 0.0
    %81 = vmatpush1.msra.mxu0 0.0
    %82 = vmatprep.subr.mxu0 0.0
    %83 = vmatpush1.msra.mxu0 0.0
    %84 = vmatprep.subr.mxu0 0.0
    %85 = vmatpush1.msra.mxu0 0.0
    %86 = vmatprep.subr.mxu0 0.0
    %87 = vmatpush1.msra.mxu0 0.0
    %88 = vmatprep.subr.mxu0 0.0
    %89 = vmatpush1.msra.mxu0 0.0
    %90 = vmatprep.subr.mxu0 0.0
    %91 = vmatpush1.msra.mxu0 0.0
    %92 = vmatprep.subr.mxu0 0.0
    %93 = vmatpush1.msra.mxu0 0.0
    %94 = vmatprep.subr.mxu0 0.0
    %95 = vmatpush1.msra.mxu0 0.0
    %96 = vmatprep.subr.mxu0 0.0
    %97 = vmatpush1.msra.mxu0 0.0
    %98 = vmatprep.subr.mxu0 0.0
    %99 = vmatpush1.msra.mxu0 0.0
    %100 = vmatprep.subr.mxu0 0.0
    %101 = vmatpush1.msra.mxu0 0.0
    %102 = vmatprep.subr.mxu0 0.0
    %103 = vmatpush1.msra.mxu0 0.0
    %104 = vmatprep.subr.mxu0 0.0
    %105 = vmatpush1.msra.mxu0 0.0
    %106 = vmatprep.mubr.f32.mxu0 0.0
    %107 = vmatmul.mubr.f32.gmra.mrb[0].mxu0 %v40
    %v108 = vpop.f32.mrb[0].mxu0
    %v109 = vadd.f32 0.0, %v108
    %v110 = vpop.f32.mrb[0].mxu0
    %111 = vdwg.mxu0
    %vm112 = vcmask 224256
    %113 = vst.msk [vmem:[#allocation7] sm:$0xf] %vm112, %v109
    // Predicated region
    $region18: #{tpu_custom_call.1} parent=1 // pred_check
      _
    $region19: #{tpu_custom_call.1} parent=1 // pred_check_branch
      %115 = sbr.rel (0) target = $region21
    $region20: #{tpu_custom_call.1} parent=1 // pred_region
      %s117 = ssub.s32 64, 64
      %118 = vsyncadd [#allocation4], %s117
      %s120 = sshll.u32 [#allocation7], 4
      %s121 = int_to_ptr.vmem [resolvable:$true] %s120
      %123 = dma.vmem_to_hbm [thread:$0]  %s121, 64, %s2, [#allocation4]
    $region21: #{tpu_custom_call.1} parent=1 // pred_fallthru
      _
    // Predicated region
    $region22: #{tpu_custom_call.1} parent=1 // pred_check
      _
    $region23: #{tpu_custom_call.1} parent=1 // pred_check_branch
      %125 = sbr.rel (0) target = $region25
    $region24: #{tpu_custom_call.1} parent=1 // pred_region
      %126 = dma.done [#allocation4], 64
    $region25: #{tpu_custom_call.1} parent=1 // pred_fallthru
      _
    %127 = vsyncpa [#allocation3], 1
    %128 = vsyncpa [#allocation6], 1
    %129 = vsyncpa [#allocation4], 1

</llo_original>
